<compile_context>
chip_gen: v7x
topology: tpu7x:2x2x1
jax: 0.10.0
libtpu: 0.0.40
codegen_flags: <defaults>
</compile_context>

<pallas_src>
import functools

import jax
import jax.numpy as jnp
from jax import lax
from jax.experimental import pallas as pl
from jax.experimental.pallas import tpu as pltpu


def _ogd_margin_kernel(pred_ref, label_ref, out_ref, acc_ref, *,
                       n_total, tile_n, class_size, margin):
    """One (prediction p, batch tile t) step of the margin-risk reduction."""
    t = pl.program_id(1)

    @pl.when(t == 0)
    def _():
        acc_ref[...] = jnp.zeros_like(acc_ref)

    pred = pred_ref[0].astype(jnp.float32)      # (C, tile_n) — widen on the VPU
    labels = label_ref[0]                       # (1, tile_n) int32

    # Correct-class mask from a sublane iota (classes live on sublanes).
    class_ids = lax.broadcasted_iota(jnp.int32, (class_size, tile_n), 0)
    class_mask = class_ids == labels            # (C, tile_n)

    # Score of the correct class per column, broadcast back over classes.
    correct = jnp.sum(jnp.where(class_mask, pred, 0.0), axis=0, keepdims=True)

    hinge = jnp.maximum(0.0, jnp.float32(margin) - (correct - pred))
    viol = jnp.where(class_mask, 0.0, hinge)    # drop the target-class row

    # Ragged last tile: mask padded columns (statically skipped if divisible).
    if n_total % tile_n != 0:
        col_ids = lax.broadcasted_iota(jnp.int32, (1, tile_n), 1)
        col_valid = (t * tile_n + col_ids) < n_total
        viol = jnp.where(col_valid, viol, 0.0)

    acc_ref[...] += viol                        # element-wise accumulate (VPU)

    @pl.when(t == pl.num_programs(1) - 1)
    def _():
        total = jnp.sum(jnp.sum(acc_ref[...], axis=1, keepdims=True),
                        axis=0, keepdims=True)  # (1, 1)
        out_ref[...] = total.reshape(1, 1, 1)


def ogd_objective(pred_list, y_list, class_size, margin=1.0):
    """OGDObjective.forward: summed margin risk over the model's prediction list."""
    # Single fused stack+transpose copy -> lane-dense (P, C, N) layout.
    preds = jnp.stack([jnp.transpose(p) for p in pred_list], axis=0)
    labels = jnp.stack([y.astype(jnp.int32) for y in y_list], axis=0)[:, None, :]
    num_preds, c, n = preds.shape
    assert c == class_size

    # Tile the batch (lane) axis: multiples of 128, ~2 MiB per pred block.
    target_block_bytes = 2 * 1024 * 1024
    cols = max(128, (target_block_bytes // (c * preds.dtype.itemsize)) // 128 * 128)
    tile_n = n if n <= cols else cols
    n_tiles = pl.cdiv(n, tile_n)

    kernel = functools.partial(
        _ogd_margin_kernel,
        n_total=n, tile_n=tile_n, class_size=class_size, margin=float(margin))

    partials = pl.pallas_call(
        kernel,
        out_shape=jax.ShapeDtypeStruct((num_preds, 1, 1), jnp.float32),
        grid_spec=pltpu.PrefetchScalarGridSpec(
            num_scalar_prefetch=0,
            grid=(num_preds, n_tiles),
            in_specs=[
                pl.BlockSpec((1, c, tile_n), lambda p, t: (p, 0, t)),
                pl.BlockSpec((1, 1, tile_n), lambda p, t: (p, 0, t)),
            ],
            out_specs=pl.BlockSpec((1, 1, 1), lambda p, t: (p, 0, 0)),
            scratch_shapes=[pltpu.VMEM((c, tile_n), jnp.float32)],
        ),
        compiler_params=pltpu.CompilerParams(
            # P list entries are independent (megacore-parallel on v7x); the
            # batch-tile axis accumulates into resident scratch -> "arbitrary".
            dimension_semantics=("parallel", "arbitrary"),
        ),
    )(preds, labels)

    # mean over samples and over the C-1 wrong classes, summed over the list.
    # TODO(synk): if the real MarginLoss divides by C (torch MultiMarginLoss
    # convention) instead of C-1, change the denominator here.
    scale = 1.0 / (float(n) * float(max(class_size - 1, 1)))
    return jnp.sum(partials) * scale


if __name__ == "__main__":
    key = jax.random.PRNGKey(0)
    batch = 8
    class_size = 16
    n_preds = 2  # length of model.pred_list / model.y_list

    keys = jax.random.split(key, 2 * n_preds)
    pred_list = [
        jax.random.normal(keys[2 * i], (batch, class_size), dtype=jnp.float32)
        for i in range(n_preds)
    ]
    y_list = [
        jax.random.randint(keys[2 * i + 1], (batch,), 0, class_size, dtype=jnp.int32)
        for i in range(n_preds)
    ]

    risk = ogd_objective(pred_list, y_list, class_size)
    jax.block_until_ready(risk)

    # pure-JAX reference check (matches the PyTorch MarginLoss semantics)
    def ref_margin(pred, y):
        oh = jax.nn.one_hot(y, class_size, dtype=jnp.float32)
        correct = jnp.sum(pred * oh, axis=-1, keepdims=True)
        viol = jnp.maximum(0.0, 1.0 - (correct - pred)) * (1.0 - oh)
        return jnp.mean(jnp.sum(viol, axis=-1) / (class_size - 1))

    ref = sum(ref_margin(p, y) for p, y in zip(pred_list, y_list))
    assert jnp.allclose(risk, ref, atol=1e-5), (risk, ref)

    print("KERNEL_OK")
</pallas_src>

<mosaic_0001>
module attributes {stable_mosaic.version = 11 : i64} {
  func.func @_ogd_margin_kernel(%arg0: i32, %arg1: i32, %arg2: memref<1x16x8xf32, #tpu.memory_space<vmem>>, %arg3: memref<1x1x8xi32, #tpu.memory_space<vmem>>, %arg4: memref<1x1x1xf32, #tpu.memory_space<vmem>>, %arg5: memref<16x8xf32, #tpu.memory_space<vmem>>) attributes {dimension_semantics = [#tpu.dimension_semantics<parallel>, #tpu.dimension_semantics<arbitrary>], iteration_bounds = array<i64: 2, 1>, scalar_prefetch = 0 : i64, scratch_operands = 1 : i64, tpu.core_type = #tpu.core_type<tc>, window_params = [{transform_indices = @transform_0, window_bounds = array<i64: 1, 16, 8>}, {transform_indices = @transform_1, window_bounds = array<i64: 1, 1, 8>}, {transform_indices = @transform_2, window_bounds = array<i64: 1, 1, 1>}]} {
    %c0_i32 = arith.constant 0 : i32
    %0 = arith.cmpi eq, %arg1, %c0_i32 : i32
    %1 = arith.extui %0 : i1 to i32
    %c0_i32_0 = arith.constant 0 : i32
    %2 = arith.cmpi ne, %1, %c0_i32_0 : i32
    scf.if %2 {
      %cst_16 = arith.constant 0.000000e+00 : f32
      %28 = vector.broadcast %cst_16 : f32 to vector<16x8xf32>
      %c0_17 = arith.constant 0 : index
      %c0_18 = arith.constant 0 : index
      %29 = vector.load %arg5[%c0_17, %c0_18] : memref<16x8xf32, #tpu.memory_space<vmem>>, vector<16x8xf32>
      tpu.vector_store %arg5[%c0_17, %c0_18], %28 {strides = array<i32>} : memref<16x8xf32, #tpu.memory_space<vmem>>, vector<16x8xf32>,
    } else {
    }
    %c0 = arith.constant 0 : index
    %c0_1 = arith.constant 0 : index
    %c0_2 = arith.constant 0 : index
    %3 = vector.load %arg2[%c0, %c0_1, %c0_2] : memref<1x16x8xf32, #tpu.memory_space<vmem>>, vector<1x16x8xf32>
    %4 = vector.shape_cast %3 : vector<1x16x8xf32> to vector<16x8xf32>
    %c0_3 = arith.constant 0 : index
    %c0_4 = arith.constant 0 : index
    %c0_5 = arith.constant 0 : index
    %5 = vector.load %arg3[%c0_3, %c0_4, %c0_5] : memref<1x1x8xi32, #tpu.memory_space<vmem>>, vector<1x1x8xi32>
    %6 = vector.shape_cast %5 : vector<1x1x8xi32> to vector<1x8xi32>
    %7 = tpu.iota {dimensions = array<i32: 0>} : vector<16x8xi32>
    %8 = vector.broadcast %6 : vector<1x8xi32> to vector<16x8xi32>
    %9 = arith.cmpi eq, %7, %8 : vector<16x8xi32>
    %cst = arith.constant 0.000000e+00 : f32
    %10 = vector.broadcast %cst : f32 to vector<16x8xf32>
    %11 = arith.select %9, %4, %10 : vector<16x8xi1>, vector<16x8xf32>
    %cst_6 = arith.constant dense<0.000000e+00> : vector<8xf32>
    %12 = vector.multi_reduction <add>, %11, %cst_6 [0] : vector<16x8xf32> to vector<8xf32>
    %13 = vector.shape_cast %12 : vector<8xf32> to vector<1x8xf32>
    %14 = vector.broadcast %13 : vector<1x8xf32> to vector<16x8xf32>
    %15 = arith.subf %14, %4 : vector<16x8xf32>
    %cst_7 = arith.constant 1.000000e+00 : f32
    %16 = vector.broadcast %cst_7 : f32 to vector<16x8xf32>
    %17 = arith.subf %16, %15 : vector<16x8xf32>
    %cst_8 = arith.constant 0.000000e+00 : f32
    %18 = vector.broadcast %cst_8 : f32 to vector<16x8xf32>
    %19 = arith.maximumf %18, %17 : vector<16x8xf32>
    %cst_9 = arith.constant 0.000000e+00 : f32
    %20 = vector.broadcast %cst_9 : f32 to vector<16x8xf32>
    %21 = arith.select %9, %20, %19 : vector<16x8xi1>, vector<16x8xf32>
    %c0_10 = arith.constant 0 : index
    %c0_11 = arith.constant 0 : index
    %22 = vector.load %arg5[%c0_10, %c0_11] : memref<16x8xf32, #tpu.memory_space<vmem>>, vector<16x8xf32>
    %23 = arith.addf %22, %21 : vector<16x8xf32>
    %c0_12 = arith.constant 0 : index
    %c0_13 = arith.constant 0 : index
    %24 = vector.load %arg5[%c0_12, %c0_13] : memref<16x8xf32, #tpu.memory_space<vmem>>, vector<16x8xf32>
    tpu.vector_store %arg5[%c0_12, %c0_13], %23 {strides = array<i32>} : memref<16x8xf32, #tpu.memory_space<vmem>>, vector<16x8xf32>,
    %c0_i32_14 = arith.constant 0 : i32
    %25 = arith.cmpi eq, %arg1, %c0_i32_14 : i32
    %26 = arith.extui %25 : i1 to i32
    %c0_i32_15 = arith.constant 0 : i32
    %27 = arith.cmpi ne, %26, %c0_i32_15 : i32
    scf.if %27 {
      %c0_16 = arith.constant 0 : index
      %c0_17 = arith.constant 0 : index
      %28 = vector.load %arg5[%c0_16, %c0_17] : memref<16x8xf32, #tpu.memory_space<vmem>>, vector<16x8xf32>
      %cst_18 = arith.constant dense<0.000000e+00> : vector<16xf32>
      %29 = vector.multi_reduction <add>, %28, %cst_18 [1] : vector<16x8xf32> to vector<16xf32>
      %30 = vector.shape_cast %29 : vector<16xf32> to vector<16x1xf32>
      %cst_19 = arith.constant dense<0.000000e+00> : vector<1xf32>
      %31 = vector.multi_reduction <add>, %30, %cst_19 [0] : vector<16x1xf32> to vector<1xf32>
      %32 = vector.shape_cast %31 : vector<1xf32> to vector<1x1xf32>
      %33 = vector.shape_cast %32 : vector<1x1xf32> to vector<1x1x1xf32>
      %c0_20 = arith.constant 0 : index
      %c0_21 = arith.constant 0 : index
      %c0_22 = arith.constant 0 : index
      %34 = vector.load %arg4[%c0_20, %c0_21, %c0_22] : memref<1x1x1xf32, #tpu.memory_space<vmem>>, vector<1x1x1xf32>
      tpu.vector_store %arg4[%c0_20, %c0_21, %c0_22], %33 {strides = array<i32>} : memref<1x1x1xf32, #tpu.memory_space<vmem>>, vector<1x1x1xf32>,
    } else {
    }
    return
  }
  func.func @transform_0(%arg0: i32, %arg1: i32) -> (i32, i32, i32) {
    %c0_i32 = arith.constant 0 : i32
    %c0_i32_0 = arith.constant 0 : i32
    return %arg0, %c0_i32, %arg1 : i32, i32, i32
  }
  func.func @transform_1(%arg0: i32, %arg1: i32) -> (i32, i32, i32) {
    %c0_i32 = arith.constant 0 : i32
    %c0_i32_0 = arith.constant 0 : i32
    return %arg0, %c0_i32, %arg1 : i32, i32, i32
  }
  func.func @transform_2(%arg0: i32, %arg1: i32) -> (i32, i32, i32) {
    %c0_i32 = arith.constant 0 : i32
    %c0_i32_0 = arith.constant 0 : i32
    %c0_i32_1 = arith.constant 0 : i32
    return %arg0, %c0_i32, %c0_i32_0 : i32, i32, i32
  }
}

</mosaic_0001>

<llo_original>
// kernel: tpu_custom_call.1
$region0: #{tpu_custom_call.1}
  #allocation0 [shape = 'u32[]', space=smem, size = 0x4, offset = 0x4, fixed_abs, tag = 'smem constant byte address 0x4 - core index']
  #allocation1 [shape = 'u32[144,128]{1,0:T(1,128)}', space=vmem, size = 0x12000, scoped, tag = 'internal scratch']
  #allocation2 [shape = 'f32[16,8]{1,0:T(8,128)}', space=vmem, size = 0x2000, scoped, tag = 'scratch operand']
  %s0 = inlined_call_operand.vmem [shape: f32[2,16,8], index: 0, kind: input, shape index: {}]
  %s1 = inlined_call_operand.vmem [shape: s32[2,1,8], index: 1, kind: input, shape index: {}]
  %s2 = inlined_call_operand.vmem [shape: f32[2,1,1], index: 2, kind: output, shape index: {}]
  %s3 = sld [smem:[#allocation0]]
  $region49: #{tpu_custom_call.1} parent=0
    _
  %s5 = ssub.s32 1, %s3
  %s6 = scalar_select 0, %s5, %s3
  loop: start=0, step=1, limit=4
  $region2: #{tpu_custom_call.1} parent=0 // loop_pre_header
    _
  $region3: #{tpu_custom_call.1} parent=0 // loop_header
    %s8 = sphi 0, %s12
    %p9 = scmp.ge.s32.totalorder %s8, 4
    %s15 = sphi 0, %s27
    %s16 = sphi 0, %s23
    %s17 = sphi 0, %s15
    %s18 = sphi 0, %s16
    %s19 = sphi 0, %s17
    %s20 = sphi 0, %s18
    %s32 = sphi 0, %s34
    %s35 = sphi 0, %s32
    %s36 = sphi 0, %s35
    %s52 = sphi 0, %s36
    %s60 = sphi 0, %s62
    %s63 = sphi 0, %s60
    %s64 = sphi 0, %s63
    %s80 = sphi 0, %s64
    %s86 = sphi 0, %s88
    %s89 = sphi 0, %s86
    %s90 = sphi 0, %s89
    %s106 = sphi 0, %s90
  $region4: #{tpu_custom_call.1} parent=0 // loop_header_branch
    %11 = sbr.rel (%p9) target = $region8
  $region5: #{tpu_custom_call.1} parent=0 // loop_body
    %s13 = ssub.s32 %s8, 1
    %s14 = ssub.s32 %s8, 2
    %s21 = sadd.s32 1, %s16
    %p22 = scmp.ge.s32.totalorder %s21, 1
    %s23 = scalar_select %p22, 0, %s21
    %s24 = sadd.s32 1, %s15
    %s25 = scalar_select %p22, %s24, %s15
    %p26 = scmp.ge.s32.totalorder %s25, 2
    %s27 = scalar_select %p26, 0, %s25
    %s28 = ssub.s32 %s15, %s27
    %s29 = ssub.s32 %s16, %s23
    %s30 = sor.u32 %s28, %s29
    %p31 = scmp.eq.s32.totalorder %s30, 0
    %s33 = sadd.s32 %s32, 1
    %s34 = scalar_select %p31, %s32, %s33
    %p37 = pneg %p31
    %p38 = scmp.eq.s32.totalorder %s8, 1
    %p39 = por %p37, %p38
    %p40 = scmp.ne.s32.totalorder %s32, %s35
    %p41 = scmp.eq.s32.totalorder %s8, 0
    %p42 = por %p40, %p41
    %p43 = scmp.ne.s32.totalorder %s32, %s35
    %p44 = scmp.eq.s32.totalorder %s13, 1
    %p45 = por %p43, %p44
    %p46 = scmp.ne.s32.totalorder %s35, %s36
    %p47 = scmp.eq.s32.totalorder %s13, 0
    %p48 = por %p46, %p47
    %p49 = scmp.ne.s32.totalorder %s35, %s36
    %p50 = scmp.eq.s32.totalorder %s14, 1
    %p51 = por %p49, %p50
    %p53 = scmp.ne.s32.totalorder %s36, %s52
    %p54 = scmp.eq.s32.totalorder %s14, 0
    %p55 = por %p53, %p54
    %s56 = ssub.s32 %s15, %s27
    %s57 = ssub.s32 %s16, %s23
    %s58 = sor.u32 %s56, %s57
    %p59 = scmp.eq.s32.totalorder %s58, 0
    %s61 = sadd.s32 %s60, 1
    %s62 = scalar_select %p59, %s60, %s61
    %p65 = pneg %p59
    %p66 = scmp.eq.s32.totalorder %s8, 1
    %p67 = por %p65, %p66
    %p68 = scmp.ne.s32.totalorder %s60, %s63
    %p69 = scmp.eq.s32.totalorder %s8, 0
    %p70 = por %p68, %p69
    %p71 = scmp.ne.s32.totalorder %s60, %s63
    %p72 = scmp.eq.s32.totalorder %s13, 1
    %p73 = por %p71, %p72
    %p74 = scmp.ne.s32.totalorder %s63, %s64
    %p75 = scmp.eq.s32.totalorder %s13, 0
    %p76 = por %p74, %p75
    %p77 = scmp.ne.s32.totalorder %s63, %s64
    %p78 = scmp.eq.s32.totalorder %s14, 1
    %p79 = por %p77, %p78
    %p81 = scmp.ne.s32.totalorder %s64, %s80
    %p82 = scmp.eq.s32.totalorder %s14, 0
    %p83 = por %p81, %p82
    %s84 = ssub.s32 %s15, %s27
    %p85 = scmp.eq.s32.totalorder %s84, 0
    %s87 = sadd.s32 %s86, 1
    %s88 = scalar_select %p85, %s86, %s87
    %p91 = pneg %p85
    %p92 = scmp.eq.s32.totalorder %s8, 1
    %p93 = por %p91, %p92
    %p94 = scmp.ne.s32.totalorder %s86, %s89
    %p95 = scmp.eq.s32.totalorder %s8, 0
    %p96 = por %p94, %p95
    %p97 = scmp.ne.s32.totalorder %s86, %s89
    %p98 = scmp.eq.s32.totalorder %s13, 1
    %p99 = por %p97, %p98
    %p100 = scmp.ne.s32.totalorder %s89, %s90
    %p101 = scmp.eq.s32.totalorder %s13, 0
    %p102 = por %p100, %p101
    %p103 = scmp.ne.s32.totalorder %s89, %s90
    %p104 = scmp.eq.s32.totalorder %s14, 1
    %p105 = por %p103, %p104
    %p107 = scmp.ne.s32.totalorder %s90, %s106
    %p108 = scmp.eq.s32.totalorder %s14, 0
    %p109 = por %p107, %p108
    %p110 = scmp.le.s32.totalorder 1, %s8
    %p111 = scmp.lt.s32.totalorder %s8, 3
    %p112 = pnand %p110, %p111
    %p113 = pneg %p112
    // Predicated region
    $region9: #{tpu_custom_call.1} parent=5 // pred_check
      _
    $region10: #{tpu_custom_call.1} parent=5 // pred_check_branch
      %115 = sbr.rel (%p112) target = $region12
    $region11: #{tpu_custom_call.1} parent=5 // pred_region
      %s116 = ssub.s32 %s8, 1
    $region12: #{tpu_custom_call.1} parent=5 // pred_fallthru
      _
    %p117 = scmp.lt.s32.totalorder %s8, 2
    // Predicated region
    $region13: #{tpu_custom_call.1} parent=5 // pred_check
      %p118 = pneg %p117
    $region14: #{tpu_custom_call.1} parent=5 // pred_check_branch
      %120 = sbr.rel (%p118) target = $region16
    $region15: #{tpu_custom_call.1} parent=5 // pred_region
      // Predicated region
      $region17: #{tpu_custom_call.1} parent=15 // pred_check
        %p121 = pneg %p42
      $region18: #{tpu_custom_call.1} parent=15 // pred_check_branch
        %123 = sbr.rel (%p121) target = $region20
      $region19: #{tpu_custom_call.1} parent=15 // pred_region
        %p124 = scmp.lt.s32.totalorder %s15, 1
        %s125 = scalar_select %p124, %s15, 1
        %p126 = scmp.lt.s32.totalorder %s16, 0
        %s127 = scalar_select %p126, %s16, 0
        %s128 = smul.addr %s125, 2
        %s129 = sadd.s32 %s127, %s128
        %s130 = smul.addr %s129, 8
        %s131 = scalar_lea.vmem %s0, %s130
      $region20: #{tpu_custom_call.1} parent=15 // pred_fallthru
        _
      // Predicated region
      $region21: #{tpu_custom_call.1} parent=15 // pred_check
        %p132 = pneg %p70
      $region22: #{tpu_custom_call.1} parent=15 // pred_check_branch
        %134 = sbr.rel (%p132) target = $region24
      $region23: #{tpu_custom_call.1} parent=15 // pred_region
        %p135 = scmp.lt.s32.totalorder %s15, 1
        %s136 = scalar_select %p135, %s15, 1
        %p137 = scmp.lt.s32.totalorder %s16, 0
        %s138 = scalar_select %p137, %s16, 0
        %s139 = sadd.s32 %s138, %s136
        %s140 = scalar_lea.vmem %s1, %s139
      $region24: #{tpu_custom_call.1} parent=15 // pred_fallthru
        _
    $region16: #{tpu_custom_call.1} parent=5 // pred_fallthru
      _
    %p141 = scmp.le.s32.totalorder 1, %s8
    %p142 = scmp.lt.s32.totalorder %s8, 3
    %p143 = pnand %p141, %p142
    %p144 = pneg %p143
    // Predicated region
    $region25: #{tpu_custom_call.1} parent=5 // pred_check
      _
    $region26: #{tpu_custom_call.1} parent=5 // pred_check_branch
      %146 = sbr.rel (%p143) target = $region28
    $region27: #{tpu_custom_call.1} parent=5 // pred_region
      %s147 = ssub.s32 %s8, 1
      %p148 = scmp.lt.s32.totalorder %s17, 1
      %s149 = scalar_select %p148, %s17, 1
      %p150 = scmp.lt.s32.totalorder %s18, 0
      %s151 = scalar_select %p150, %s18, 0
      %s152 = smul.addr %s149, 2
      %s153 = sadd.s32 %s151, %s152
      %s154 = smul.addr %s153, 8
      %s155 = scalar_lea.vmem %s0, %s154
      %p156 = pneg %p48
      %p157 = pneg %p45
      %p158 = scmp.lt.s32.totalorder %s17, 1
      %s159 = scalar_select %p158, %s17, 1
      %p160 = scmp.lt.s32.totalorder %s18, 0
      %s161 = scalar_select %p160, %s18, 0
      %s162 = sadd.s32 %s161, %s159
      %s163 = scalar_lea.vmem %s1, %s162
      %p164 = pneg %p76
      %p165 = pneg %p73
      %p166 = pneg %p102
      %p167 = pneg %p99
      %p168 = scmp.lt.s32.totalorder %s17, 1
      %s169 = scalar_select %p168, %s17, 1
      %s170 = scalar_lea.vmem %s2, %s169
      %p171 = scmp.lt.s32.totalorder %s17, 1
      %s172 = scalar_select %p171, %s17, 1
      %p173 = scmp.lt.s32.totalorder %s18, 0
      %s174 = scalar_select %p173, %s18, 0
      %s175 = smul.addr %s172, 2
      %s176 = sadd.s32 %s174, %s175
      %s177 = smul.addr %s176, 8
      %s178 = scalar_lea.vmem %s0, %s177
      %p179 = scmp.lt.s32.totalorder %s17, 1
      %s180 = scalar_select %p179, %s17, 1
      %p181 = scmp.lt.s32.totalorder %s18, 0
      %s182 = scalar_select %p181, %s18, 0
      %s183 = sadd.s32 %s182, %s180
      %s184 = scalar_lea.vmem %s1, %s183
      %p185 = scmp.lt.s32.totalorder %s17, 1
      %s186 = scalar_select %p185, %s17, 1
      %s187 = scalar_lea.vmem %s2, %s186
      %p188 = scmp.eq.s32.totalorder %s18, 0
      // Predicated region
      $region29: #{tpu_custom_call.1} parent=27 // pred_check
        %p189 = pneg %p188
      $region30: #{tpu_custom_call.1} parent=27 // pred_check_branch
        %191 = sbr.rel (%p189) target = $region32
      $region31: #{tpu_custom_call.1} parent=27 // pred_region
        %vm192 = vcmask 64512
        %193 = vst.msk [vmem:[#allocation2] sm:$0xff] %vm192, 0.0
        %194 = vst.msk [vmem:[#allocation2 + $0x8] sm:$0xff] %vm192, 0.0
      $region32: #{tpu_custom_call.1} parent=27 // pred_fallthru
        _
      %v195 = vld [vmem:[%s178] sm:$0xff]
      %v196 = vld [vmem:[%s178 + $0x8] sm:$0xff]
      %v197 = vld [vmem:[%s184] sm:$0x1]
      %v198 = vlaneseq
      %v199 = vshrl.u32 %v198, 7
      %v200 = vadd.s32 %v199, 8
      %v201 = vlaneseq
      %v202 = vshrl.u32 %v201, 7
      %v203 = vsub.s32 0, %v202
      %v204 = vrot.slane %v197, %v203
      %vm205 = vcmp.eq.s32.totalorder %v199, %v204
      %vm206 = vcmp.eq.s32.totalorder %v200, %v204
      %v207 = vsel %vm205, %v195, 0.0
      %v208 = vsel %vm206, %v196, 0.0
      %vm209 = vcmask 64512
      %v210 = vsel %vm209, %v207, 0.0
      %v211 = vsel %vm209, %v208, 0.0
      %v212 = vadd.f32 %v210, %v211
      %v213 = vrot.slane %v212, 4
      %v214 = vadd.f32 %v212, %v213
      %v215 = vrot.slane %v214, 2
      %v216 = vadd.f32 %v214, %v215
      %v217 = vrot.slane %v216, 1
      %v218 = vadd.f32 %v216, %v217
      %v219 = vsub.f32 %v218, %v195
      %v220 = vsub.f32 %v218, %v196
      %v221 = vsub.f32 1.0, %v219
      %v222 = vsub.f32 1.0, %v220
      %v223 = vmax.f32 %v221, 0.0
      %v224 = vmax.f32 %v222, 0.0
      %v225 = vsel %vm205, 0.0, %v223
      %v226 = vsel %vm206, 0.0, %v224
      %v227 = vld [vmem:[#allocation2] sm:$0xff]
      %v228 = vld [vmem:[#allocation2 + $0x8] sm:$0xff]
      %v229 = vadd.f32 %v227, %v225
      %v230 = vadd.f32 %v228, %v226
      %231 = vst.msk [vmem:[#allocation2] sm:$0xff] %vm209, %v229
      %232 = vst.msk [vmem:[#allocation2 + $0x8] sm:$0xff] %vm209, %v230
      // Predicated region
      $region33: #{tpu_custom_call.1} parent=27 // pred_check
        %p233 = pneg %p188
      $region34: #{tpu_custom_call.1} parent=27 // pred_check_branch
        %235 = sbr.rel (%p233) target = $region36
      $region35: #{tpu_custom_call.1} parent=27 // pred_region
        %v236 = vld [vmem:[#allocation2] sm:$0xff]
        %v237 = vld [vmem:[#allocation2 + $0x8] sm:$0xff]
        %v238 = vsel %vm209, %v236, 0.0
        %239 = vadd.xlane.f32.xlu0 %v238
        %v240 = vpop.xlane.xlu0 %239
        %v241 = vsel %vm209, %v237, 0.0
        %242 = vadd.xlane.f32.xlu0 %v241
        %v243 = vpop.xlane.xlu0 %242
        %v244 = vadd.f32 %v240, %v243
        %v245 = vrot.slane %v244, 4
        %v246 = vadd.f32 %v244, %v245
        %v247 = vrot.slane %v246, 2
        %v248 = vadd.f32 %v246, %v247
        %v249 = vrot.slane %v248, 1
        %v250 = vadd.f32 %v248, %v249
        %vm251 = vcmask 0
        %252 = vst.msk [vmem:[%s187] sm:$0x1] %vm251, %v250
      $region36: #{tpu_custom_call.1} parent=27 // pred_fallthru
        _
      %p253 = scmp.lt.s32.totalorder %s17, 1
      %s254 = scalar_select %p253, %s17, 1
      %s255 = scalar_lea.vmem %s2, %s254
      // Predicated region
      $region37: #{tpu_custom_call.1} parent=27 // pred_check
        %p256 = pneg %p99
      $region38: #{tpu_custom_call.1} parent=27 // pred_check_branch
        %258 = sbr.rel (%p256) target = $region40
      $region39: #{tpu_custom_call.1} parent=27 // pred_region
        _
      $region40: #{tpu_custom_call.1} parent=27 // pred_fallthru
        _
    $region28: #{tpu_custom_call.1} parent=5 // pred_fallthru
      _
    %p259 = scmp.le.s32.totalorder 2, %s8
    // Predicated region
    $region41: #{tpu_custom_call.1} parent=5 // pred_check
      %p260 = pneg %p259
    $region42: #{tpu_custom_call.1} parent=5 // pred_check_branch
      %262 = sbr.rel (%p260) target = $region44
    $region43: #{tpu_custom_call.1} parent=5 // pred_region
      %s263 = ssub.s32 %s8, 2
      // Predicated region
      $region45: #{tpu_custom_call.1} parent=43 // pred_check
        %p264 = pneg %p105
      $region46: #{tpu_custom_call.1} parent=43 // pred_check_branch
        %266 = sbr.rel (%p264) target = $region48
      $region47: #{tpu_custom_call.1} parent=43 // pred_region
        %p267 = scmp.lt.s32.totalorder %s19, 1
        %s268 = scalar_select %p267, %s19, 1
        %s269 = scalar_lea.vmem %s2, %s268
      $region48: #{tpu_custom_call.1} parent=43 // pred_fallthru
        _
    $region44: #{tpu_custom_call.1} parent=5 // pred_fallthru
      _
  $region6: #{tpu_custom_call.1} parent=0 // loop_footer
    %s12 = sadd.s32 1, %s8
  $region7: #{tpu_custom_call.1} parent=0 // loop_footer_branch
    %7 = sbr.rel target = $region3
  $region8: #{tpu_custom_call.1} parent=0 // loop_exit
    _

</llo_original>
